<compile_context>
chip_gen: v7x
topology: tpu7x:2x2x1
jax: 0.10.0
libtpu: 0.0.40
codegen_flags: <defaults>
</compile_context>

<pallas_src>
import math

import jax
import jax.numpy as jnp
from jax.experimental import pallas as pl
from jax.experimental.pallas import tpu as pltpu


_SMALL_FALLBACK_BYTES = 256 * 1024     # below this, plain XLA elementwise wins
_LANE = 128
_VMEM_LIMIT_CAP = 48 * 1024 * 1024     # never ask Mosaic for more than this
_MIN_TOTAL_STEPS = 8                   # amortize pipeline ramp, feed both TCs


def _scale_shift_kernel(x_ref, std_ref, mean_ref, o_ref):
    # y = x * sigma + mu ; sigma/mu are (1, tf) f32 and broadcast over rows.
    x = x_ref[...].astype(jnp.float32)
    o_ref[...] = (x * std_ref[...] + mean_ref[...]).astype(o_ref.dtype)


def _cdiv(a, b):
    return -(-a // b)


def _round_down_mult(x, m):
    return (x // m) * m


def _sublane_for(dtype) -> int:
    """Row granularity: sub-32-bit dtypes pack along sublanes."""
    sz = jnp.dtype(dtype).itemsize
    if sz >= 4:
        return 8
    if sz == 2:
        return 16
    return 32


def _vmem_cap_bytes() -> int:
    try:
        cap = int(pltpu.get_tpu_info().vmem_capacity_bytes)
    except Exception:
        cap = 64 * 1024 * 1024
    # Conservative: treat capacity as per-TensorCore and never assume more
    # than v7x's 64 MiB.  Guards against a per-chip (128 MiB) report on v7x;
    # harmless on v5e/v6e since we only ever need <= 48 MiB anyway.
    return min(cap, 64 * 1024 * 1024)


def _tile_budget_bytes() -> int:
    # Budget for the 4 pipelined x/out tiles (double-buffered input + output).
    return min(_vmem_cap_bytes() // 2, 32 * 1024 * 1024)


def _tile_targets_bytes():
    """(target, floor) bytes per x tile, by chip generation."""
    kind = ""
    try:
        kind = jax.devices()[0].device_kind.lower()
    except Exception:
        pass
    if "v7" in kind:
        # 3.2 TB/s HBM: ~0.35 us/step overhead is worth ~1.1 MB of traffic.
        return 6 << 20, 4 << 20
    # v5e/v6e: measured HBM roofline saturates by ~1-4 MiB tiles.
    return 4 << 20, 1 << 20


def _pick_tf(F: int, itemsize: int, sublane: int, tile_budget: int) -> int:
    """Feature tile: prefer full extent (contiguous DMA, grid-resident params)."""
    if F % _LANE != 0 or 4 * sublane * F * itemsize <= tile_budget:
        return F
    # F is a multiple of 128 but too wide for a full-extent tile: largest
    # 128-multiple divisor of F that fits with `sublane` rows.
    max_tf = tile_budget // (4 * sublane * itemsize)
    d = F // _LANE
    best = _LANE
    for k in range(1, d + 1):
        tf = _LANE * k
        if d % k == 0 and tf <= max_tf:
            best = tf
    return best


def _derive_tm(N, tf, itemsize, sublane, tile_budget, f_steps):
    """Row tile + row-step count (tile-byte target, step-count clamp, parity)."""
    target_b, floor_b = _tile_targets_bytes()
    tm_vmem = max(sublane, tile_budget // (4 * tf * itemsize))
    tm_target = max(sublane, target_b // (tf * itemsize))
    tm_floor = max(sublane, _round_down_mult(floor_b // (tf * itemsize), sublane))

    tm = min(tm_vmem, tm_target)
    tm = max(sublane, _round_down_mult(tm, sublane))

    # Keep the grid at >= ~8 total steps, but never shrink below the per-chip
    # tile floor ("floor first, then split for step count").
    m_needed = _cdiv(_MIN_TOTAL_STEPS, f_steps)
    if m_needed > 1:
        tm_split = max(sublane, _round_down_mult(_cdiv(N, m_needed), sublane))
        tm = min(tm, max(tm_split, tm_floor))

    if tm >= N:
        return N, 1                       # full extent: always legal
    m_steps = _cdiv(N, tm)

    # Best-effort: avoid a small odd total step count (one v7x TC would sit
    # idle for a whole step).
    total = m_steps * f_steps
    if total % 2 == 1 and total < 16:
        tm_try = max(sublane, _round_down_mult(_cdiv(N, m_steps + 1), sublane))
        if tm_try < tm and tm_try < N and (_cdiv(N, tm_try) * f_steps) % 2 == 0:
            tm = tm_try
            m_steps = _cdiv(N, tm)
    return tm, m_steps


def _scale_shift_2d(x2, mean_f32, std_f32):
    """x2: [N, F] (F a multiple of 128, or full-extent-tileable); params: [F] f32."""
    N, F = x2.shape
    itemsize = jnp.dtype(x2.dtype).itemsize
    sublane = _sublane_for(x2.dtype)
    tile_budget = _tile_budget_bytes()

    tf = _pick_tf(F, itemsize, sublane, tile_budget)
    f_steps = _cdiv(F, tf)
    tm, m_steps = _derive_tm(N, tf, itemsize, sublane, tile_budget, f_steps)

    mean2 = mean_f32.reshape(1, F)
    std2 = std_f32.reshape(1, F)

    # VMEM the pipeline needs (double-buffered x + out tiles, params) + headroom.
    needed = 2 * (2 * tm * tf * itemsize) + 2 * (2 * tf * 4)
    vmem_limit = int(min(max(needed * 1.5 + (1 << 20), 16 << 20), _VMEM_LIMIT_CAP))

    cost = pl.CostEstimate(
        flops=2 * N * F,
        transcendentals=0,
        bytes_accessed=2 * N * F * itemsize + 2 * F * 4)

    if f_steps == 1:
        # 1-D grid over rows; (1, F) param blocks are grid-resident.
        grid = (m_steps,)
        in_specs = [
            pl.BlockSpec((tm, F), lambda i: (i, 0)),     # x tile
            pl.BlockSpec((1, F), lambda i: (0, 0)),      # stddev (f32, resident)
            pl.BlockSpec((1, F), lambda i: (0, 0)),      # mean   (f32, resident)
        ]
        out_specs = pl.BlockSpec((tm, F), lambda i: (i, 0))
        dims = ("parallel",)
    else:
        grid = (m_steps, f_steps)
        in_specs = [
            pl.BlockSpec((tm, tf), lambda i, j: (i, j)),
            pl.BlockSpec((1, tf), lambda i, j: (0, j)),
            pl.BlockSpec((1, tf), lambda i, j: (0, j)),
        ]
        out_specs = pl.BlockSpec((tm, tf), lambda i, j: (i, j))
        dims = ("parallel", "parallel")

    return pl.pallas_call(
        _scale_shift_kernel,
        out_shape=jax.ShapeDtypeStruct((N, F), x2.dtype),
        grid_spec=pltpu.PrefetchScalarGridSpec(
            num_scalar_prefetch=0,
            grid=grid,
            in_specs=in_specs,
            out_specs=out_specs,
        ),
        compiler_params=pltpu.CompilerParams(
            dimension_semantics=dims,
            vmem_limit_bytes=vmem_limit),
        cost_estimate=cost,
    )(x2, std2, mean2)


def scale_shift(x: jax.Array, mean: jax.Array, stddev: jax.Array) -> jax.Array:
    """y = x * stddev + mean, with per-feature params broadcast over the last axis.

    x:      [..., F]   (any leading dims)
    mean:   [F]
    stddev: [F]
    """
    orig_shape = x.shape
    F = orig_shape[-1]
    assert mean.shape == (F,) and stddev.shape == (F,), "params must be [F]"
    N = int(math.prod(orig_shape[:-1])) if len(orig_shape) > 1 else 1

    mean_f32 = mean.astype(jnp.float32)
    std_f32 = stddev.astype(jnp.float32)

    itemsize = jnp.dtype(x.dtype).itemsize
    total_bytes = N * F * itemsize
    if total_bytes < _SMALL_FALLBACK_BYTES:
        # Tiny tensors: custom-call + per-step overhead dwarfs data movement.
        return (x.astype(jnp.float32) * std_f32 + mean_f32).astype(x.dtype)

    x2 = x.reshape(N, F)

    if F % _LANE == 0:
        y2 = _scale_shift_2d(x2, mean_f32, std_f32)
    else:
        # Lane-dense repack: view (N, F) as (N*F/L, L) with L = lcm(F, 128),
        # padding at most reps-1 dummy rows so the repack *always* applies and
        # stores stay unmasked (lane-dense output is the biggest single lever).
        L = (F * _LANE) // math.gcd(F, _LANE)        # lcm(F, 128)
        reps = L // F                                # <= 128
        sublane = _sublane_for(x.dtype)
        if 4 * sublane * L * itemsize <= _tile_budget_bytes():
            pad = (-N) % reps
            x2p = x2 if pad == 0 else jnp.concatenate(
                [x2, jnp.zeros((pad, F), x2.dtype)], axis=0)
            n_pad = N + pad
            xl = x2p.reshape((n_pad * F) // L, L)
            yl = _scale_shift_2d(xl, jnp.tile(mean_f32, reps),
                                 jnp.tile(std_f32, reps))
            y2 = yl.reshape(n_pad, F)[:N]
        else:
            # Extremely wide non-128-aligned F: a lane-dense tile would not fit
            # VMEM on any generation.  Plain XLA is correct and still HBM-bound.
            y2 = (x2.astype(jnp.float32) * std_f32 + mean_f32).astype(x2.dtype)

    return y2.reshape(orig_shape)


if __name__ == "__main__":
    key = jax.random.PRNGKey(0)

    def make_case(k, shape, dtype=jnp.float32):
        F = shape[-1]
        k_x, k_m, k_s = jax.random.split(k, 3)
        x = jax.random.normal(k_x, shape, dtype=jnp.float32).astype(dtype)
        mean = jax.random.normal(k_m, (F,), dtype=jnp.float32)
        stddev = jax.random.uniform(k_s, (F,), dtype=jnp.float32,
                                    minval=0.5, maxval=2.0)
        return x, mean, stddev

    cases = [
        ((2, 4, 16, 32), jnp.float32),   # tiny 4-D input: plain-XLA fallback path
        ((1024, 256), jnp.float32),      # 128-aligned F: Pallas, tf = F, 1-D grid
        ((1024, 256), jnp.bfloat16),     # bf16: 16-row sublane granularity
        ((512, 160), jnp.float32),       # unaligned F, no padding needed: repack
        ((515, 160), jnp.float32),       # unaligned F with dummy-row padding
    ]
    keys = jax.random.split(key, len(cases))
    for kk, (shape, dtype) in zip(keys, cases):
        x, mean, stddev = make_case(kk, shape, dtype)
        y = jax.block_until_ready(scale_shift(x, mean, stddev))
        ref = (x.astype(jnp.float32) * stddev + mean).astype(dtype)
        assert y.shape == x.shape and y.dtype == x.dtype
        tol = 1e-5 if dtype == jnp.float32 else 2e-2
        assert jnp.allclose(y.astype(jnp.float32), ref.astype(jnp.float32),
                            atol=tol, rtol=tol), f"mismatch at {shape} {dtype}"

    print("KERNEL_OK")
</pallas_src>

<mosaic_0001>
module attributes {stable_mosaic.version = 11 : i64} {
  func.func @_scale_shift_kernel(%arg0: i32, %arg1: memref<1024x256xf32, #tpu.memory_space<vmem>>, %arg2: memref<1x256xf32, #tpu.memory_space<vmem>>, %arg3: memref<1x256xf32, #tpu.memory_space<vmem>>, %arg4: memref<1024x256xf32, #tpu.memory_space<vmem>>) attributes {dimension_semantics = [#tpu.dimension_semantics<parallel>], iteration_bounds = array<i64: 1>, scalar_prefetch = 0 : i64, scratch_operands = 0 : i64, tpu.core_type = #tpu.core_type<tc>, window_params = [{transform_indices = @transform_0, window_bounds = array<i64: 1024, 256>}, {pipeline_mode = #tpu.pipeline_mode<synchronous>, transform_indices = @transform_1, window_bounds = array<i64: 1, 256>}, {pipeline_mode = #tpu.pipeline_mode<synchronous>, transform_indices = @transform_2, window_bounds = array<i64: 1, 256>}, {transform_indices = @transform_3, window_bounds = array<i64: 1024, 256>}]} {
    %c0 = arith.constant 0 : index
    %c0_0 = arith.constant 0 : index
    %0 = vector.load %arg1[%c0, %c0_0] : memref<1024x256xf32, #tpu.memory_space<vmem>>, vector<1024x256xf32>
    %c0_1 = arith.constant 0 : index
    %c0_2 = arith.constant 0 : index
    %1 = vector.load %arg2[%c0_1, %c0_2] : memref<1x256xf32, #tpu.memory_space<vmem>>, vector<1x256xf32>
    %2 = vector.broadcast %1 : vector<1x256xf32> to vector<1024x256xf32>
    %3 = arith.mulf %0, %2 : vector<1024x256xf32>
    %c0_3 = arith.constant 0 : index
    %c0_4 = arith.constant 0 : index
    %4 = vector.load %arg3[%c0_3, %c0_4] : memref<1x256xf32, #tpu.memory_space<vmem>>, vector<1x256xf32>
    %5 = vector.broadcast %4 : vector<1x256xf32> to vector<1024x256xf32>
    %6 = arith.addf %3, %5 : vector<1024x256xf32>
    %c0_5 = arith.constant 0 : index
    %c0_6 = arith.constant 0 : index
    %7 = vector.load %arg4[%c0_5, %c0_6] : memref<1024x256xf32, #tpu.memory_space<vmem>>, vector<1024x256xf32>
    tpu.vector_store %arg4[%c0_5, %c0_6], %6 {strides = array<i32>} : memref<1024x256xf32, #tpu.memory_space<vmem>>, vector<1024x256xf32>,
    return
  }
  func.func @transform_0(%arg0: i32) -> (i32, i32) {
    %c0_i32 = arith.constant 0 : i32
    %c0_i32_0 = arith.constant 0 : i32
    return %arg0, %c0_i32 : i32, i32
  }
  func.func @transform_1(%arg0: i32) -> (i32, i32) {
    %c0_i32 = arith.constant 0 : i32
    %c0_i32_0 = arith.constant 0 : i32
    %c0_i32_1 = arith.constant 0 : i32
    return %c0_i32, %c0_i32_0 : i32, i32
  }
  func.func @transform_2(%arg0: i32) -> (i32, i32) {
    %c0_i32 = arith.constant 0 : i32
    %c0_i32_0 = arith.constant 0 : i32
    %c0_i32_1 = arith.constant 0 : i32
    return %c0_i32, %c0_i32_0 : i32, i32
  }
  func.func @transform_3(%arg0: i32) -> (i32, i32) {
    %c0_i32 = arith.constant 0 : i32
    %c0_i32_0 = arith.constant 0 : i32
    return %arg0, %c0_i32 : i32, i32
  }
}

</mosaic_0001>

<llo_original>
// kernel: tpu_custom_call.1
$region0: #{tpu_custom_call.1}
  #allocation0 [shape = 'u32[]', space=smem, size = 0x4, offset = 0x4, fixed_abs, tag = 'smem constant byte address 0x4 - core index']
  #allocation1 [shape = 'u32[144,128]{1,0:T(1,128)}', space=vmem, size = 0x12000, scoped, tag = 'internal scratch']
  %s0 = inlined_call_operand.hbm [shape: f32[1024,256], index: 0, kind: input, shape index: {}]
  %s1 = inlined_call_operand.vmem [shape: f32[1,256], index: 1, kind: input, shape index: {}]
  %s2 = inlined_call_operand.vmem [shape: f32[1,256], index: 2, kind: input, shape index: {}]
  %s3 = inlined_call_operand.hbm [shape: f32[1024,256], index: 3, kind: output, shape index: {}]
  %s4 = sld [smem:[#allocation0]]
  $region26: #{tpu_custom_call.1} parent=0
    _
  %s6 = ssub.s32 1, %s4
  %s7 = scalar_select 0, %s6, %s4
  $region1: #{tpu_custom_call.1} parent=0
    #allocation2 [shape = 'u8[1048576]{0}', space=vmem, size = 0x100000, scoped, tag = 'input window, operand 0, single buffered']
    #allocation3 [shape = 's32[1]{0}', space=sflag, size = 0x4, scoped, tag = 'scoped memory for tpu_custom_call.1']
    #allocation4 [shape = 's32[1]{0}', space=sflag, size = 0x4, scoped, tag = 'scoped memory for tpu_custom_call.1']
    #allocation5 [shape = 'u8[1048576]{0}', space=vmem, size = 0x100000, scoped, tag = 'output window, operand 0, single buffered']
    %8 = vsyncpa [#allocation3], 0
    %9 = vsyncpa [#allocation4], 0
    // Predicated region
    $region2: #{tpu_custom_call.1} parent=1 // pred_check
      _
    $region3: #{tpu_custom_call.1} parent=1 // pred_check_branch
      %11 = sbr.rel (0) target = $region5
    $region4: #{tpu_custom_call.1} parent=1 // pred_region
      %s13 = ssub.s32 32768, 32768
      %14 = vsyncadd [#allocation3], %s13
      %s15 = sshll.u32 [#allocation2], 4
      %s16 = int_to_ptr.vmem [resolvable:$true] %s15
      %21 = dma.hbm_to_vmem [thread:$0]  %s0, 32768, %s16, [#allocation3], 256, 256, 16
    $region5: #{tpu_custom_call.1} parent=1 // pred_fallthru
      _
    // Predicated region
    $region6: #{tpu_custom_call.1} parent=1 // pred_check
      _
    $region7: #{tpu_custom_call.1} parent=1 // pred_check_branch
      %23 = sbr.rel (0) target = $region9
    $region8: #{tpu_custom_call.1} parent=1 // pred_region
      _
    $region9: #{tpu_custom_call.1} parent=1 // pred_fallthru
      _
    // Predicated region
    $region10: #{tpu_custom_call.1} parent=1 // pred_check
      _
    $region11: #{tpu_custom_call.1} parent=1 // pred_check_branch
      %25 = sbr.rel (0) target = $region13
    $region12: #{tpu_custom_call.1} parent=1 // pred_region
      _
    $region13: #{tpu_custom_call.1} parent=1 // pred_fallthru
      _
    // Predicated region
    $region14: #{tpu_custom_call.1} parent=1 // pred_check
      _
    $region15: #{tpu_custom_call.1} parent=1 // pred_check_branch
      %27 = sbr.rel (0) target = $region17
    $region16: #{tpu_custom_call.1} parent=1 // pred_region
      %28 = dma.done [#allocation3], 32768
    $region17: #{tpu_custom_call.1} parent=1 // pred_fallthru
      _
    %v29 = vld [vmem:[#allocation2] sm:$0xff]
    %v30 = vld [vmem:[#allocation2 + $0x8] sm:$0xff]
    %v31 = vld [vmem:[#allocation2 + $0x10] sm:$0xff]
    %v32 = vld [vmem:[#allocation2 + $0x18] sm:$0xff]
    %v33 = vld [vmem:[#allocation2 + $0x20] sm:$0xff]
    %v34 = vld [vmem:[#allocation2 + $0x28] sm:$0xff]
    %v35 = vld [vmem:[#allocation2 + $0x30] sm:$0xff]
    %v36 = vld [vmem:[#allocation2 + $0x38] sm:$0xff]
    %v37 = vld [vmem:[#allocation2 + $0x40] sm:$0xff]
    %v38 = vld [vmem:[#allocation2 + $0x48] sm:$0xff]
    %v39 = vld [vmem:[#allocation2 + $0x50] sm:$0xff]
    %v40 = vld [vmem:[#allocation2 + $0x58] sm:$0xff]
    %v41 = vld [vmem:[#allocation2 + $0x60] sm:$0xff]
    %v42 = vld [vmem:[#allocation2 + $0x68] sm:$0xff]
    %v43 = vld [vmem:[#allocation2 + $0x70] sm:$0xff]
    %v44 = vld [vmem:[#allocation2 + $0x78] sm:$0xff]
    %v45 = vld [vmem:[#allocation2 + $0x80] sm:$0xff]
    %v46 = vld [vmem:[#allocation2 + $0x88] sm:$0xff]
    %v47 = vld [vmem:[#allocation2 + $0x90] sm:$0xff]
    %v48 = vld [vmem:[#allocation2 + $0x98] sm:$0xff]
    %v49 = vld [vmem:[#allocation2 + $0xa0] sm:$0xff]
    %v50 = vld [vmem:[#allocation2 + $0xa8] sm:$0xff]
    %v51 = vld [vmem:[#allocation2 + $0xb0] sm:$0xff]
    %v52 = vld [vmem:[#allocation2 + $0xb8] sm:$0xff]
    %v53 = vld [vmem:[#allocation2 + $0xc0] sm:$0xff]
    %v54 = vld [vmem:[#allocation2 + $0xc8] sm:$0xff]
    %v55 = vld [vmem:[#allocation2 + $0xd0] sm:$0xff]
    %v56 = vld [vmem:[#allocation2 + $0xd8] sm:$0xff]
    %v57 = vld [vmem:[#allocation2 + $0xe0] sm:$0xff]
    %v58 = vld [vmem:[#allocation2 + $0xe8] sm:$0xff]
    %v59 = vld [vmem:[#allocation2 + $0xf0] sm:$0xff]
    %v60 = vld [vmem:[#allocation2 + $0xf8] sm:$0xff]
    %v61 = vld [vmem:[#allocation2 + $0x100] sm:$0xff]
    %v62 = vld [vmem:[#allocation2 + $0x108] sm:$0xff]
    %v63 = vld [vmem:[#allocation2 + $0x110] sm:$0xff]
    %v64 = vld [vmem:[#allocation2 + $0x118] sm:$0xff]
    %v65 = vld [vmem:[#allocation2 + $0x120] sm:$0xff]
    %v66 = vld [vmem:[#allocation2 + $0x128] sm:$0xff]
    %v67 = vld [vmem:[#allocation2 + $0x130] sm:$0xff]
    %v68 = vld [vmem:[#allocation2 + $0x138] sm:$0xff]
    %v69 = vld [vmem:[#allocation2 + $0x140] sm:$0xff]
    %v70 = vld [vmem:[#allocation2 + $0x148] sm:$0xff]
    %v71 = vld [vmem:[#allocation2 + $0x150] sm:$0xff]
    %v72 = vld [vmem:[#allocation2 + $0x158] sm:$0xff]
    %v73 = vld [vmem:[#allocation2 + $0x160] sm:$0xff]
    %v74 = vld [vmem:[#allocation2 + $0x168] sm:$0xff]
    %v75 = vld [vmem:[#allocation2 + $0x170] sm:$0xff]
    %v76 = vld [vmem:[#allocation2 + $0x178] sm:$0xff]
    %v77 = vld [vmem:[#allocation2 + $0x180] sm:$0xff]
    %v78 = vld [vmem:[#allocation2 + $0x188] sm:$0xff]
    %v79 = vld [vmem:[#allocation2 + $0x190] sm:$0xff]
    %v80 = vld [vmem:[#allocation2 + $0x198] sm:$0xff]
    %v81 = vld [vmem:[#allocation2 + $0x1a0] sm:$0xff]
    %v82 = vld [vmem:[#allocation2 + $0x1a8] sm:$0xff]
    %v83 = vld [vmem:[#allocation2 + $0x1b0] sm:$0xff]
    %v84 = vld [vmem:[#allocation2 + $0x1b8] sm:$0xff]
    %v85 = vld [vmem:[#allocation2 + $0x1c0] sm:$0xff]
    %v86 = vld [vmem:[#allocation2 + $0x1c8] sm:$0xff]
    %v87 = vld [vmem:[#allocation2 + $0x1d0] sm:$0xff]
    %v88 = vld [vmem:[#allocation2 + $0x1d8] sm:$0xff]
    %v89 = vld [vmem:[#allocation2 + $0x1e0] sm:$0xff]
    %v90 = vld [vmem:[#allocation2 + $0x1e8] sm:$0xff]
    %v91 = vld [vmem:[#allocation2 + $0x1f0] sm:$0xff]
    %v92 = vld [vmem:[#allocation2 + $0x1f8] sm:$0xff]
    %v93 = vld [vmem:[#allocation2 + $0x200] sm:$0xff]
    %v94 = vld [vmem:[#allocation2 + $0x208] sm:$0xff]
    %v95 = vld [vmem:[#allocation2 + $0x210] sm:$0xff]
    %v96 = vld [vmem:[#allocation2 + $0x218] sm:$0xff]
    %v97 = vld [vmem:[#allocation2 + $0x220] sm:$0xff]
    %v98 = vld [vmem:[#allocation2 + $0x228] sm:$0xff]
    %v99 = vld [vmem:[#allocation2 + $0x230] sm:$0xff]
    %v100 = vld [vmem:[#allocation2 + $0x238] sm:$0xff]
    %v101 = vld [vmem:[#allocation2 + $0x240] sm:$0xff]
    %v102 = vld [vmem:[#allocation2 + $0x248] sm:$0xff]
    %v103 = vld [vmem:[#allocation2 + $0x250] sm:$0xff]
    %v104 = vld [vmem:[#allocation2 + $0x258] sm:$0xff]
    %v105 = vld [vmem:[#allocation2 + $0x260] sm:$0xff]
    %v106 = vld [vmem:[#allocation2 + $0x268] sm:$0xff]
    %v107 = vld [vmem:[#allocation2 + $0x270] sm:$0xff]
    %v108 = vld [vmem:[#allocation2 + $0x278] sm:$0xff]
    %v109 = vld [vmem:[#allocation2 + $0x280] sm:$0xff]
    %v110 = vld [vmem:[#allocation2 + $0x288] sm:$0xff]
    %v111 = vld [vmem:[#allocation2 + $0x290] sm:$0xff]
    %v112 = vld [vmem:[#allocation2 + $0x298] sm:$0xff]
    %v113 = vld [vmem:[#allocation2 + $0x2a0] sm:$0xff]
    %v114 = vld [vmem:[#allocation2 + $0x2a8] sm:$0xff]
    %v115 = vld [vmem:[#allocation2 + $0x2b0] sm:$0xff]
    %v116 = vld [vmem:[#allocation2 + $0x2b8] sm:$0xff]
    %v117 = vld [vmem:[#allocation2 + $0x2c0] sm:$0xff]
    %v118 = vld [vmem:[#allocation2 + $0x2c8] sm:$0xff]
    %v119 = vld [vmem:[#allocation2 + $0x2d0] sm:$0xff]
    %v120 = vld [vmem:[#allocation2 + $0x2d8] sm:$0xff]
    %v121 = vld [vmem:[#allocation2 + $0x2e0] sm:$0xff]
    %v122 = vld [vmem:[#allocation2 + $0x2e8] sm:$0xff]
    %v123 = vld [vmem:[#allocation2 + $0x2f0] sm:$0xff]
    %v124 = vld [vmem:[#allocation2 + $0x2f8] sm:$0xff]
    %v125 = vld [vmem:[#allocation2 + $0x300] sm:$0xff]
    %v126 = vld [vmem:[#allocation2 + $0x308] sm:$0xff]
    %v127 = vld [vmem:[#allocation2 + $0x310] sm:$0xff]
    %v128 = vld [vmem:[#allocation2 + $0x318] sm:$0xff]
    %v129 = vld [vmem:[#allocation2 + $0x320] sm:$0xff]
    %v130 = vld [vmem:[#allocation2 + $0x328] sm:$0xff]
    %v131 = vld [vmem:[#allocation2 + $0x330] sm:$0xff]
    %v132 = vld [vmem:[#allocation2 + $0x338] sm:$0xff]
    %v133 = vld [vmem:[#allocation2 + $0x340] sm:$0xff]
    %v134 = vld [vmem:[#allocation2 + $0x348] sm:$0xff]
    %v135 = vld [vmem:[#allocation2 + $0x350] sm:$0xff]
    %v136 = vld [vmem:[#allocation2 + $0x358] sm:$0xff]
    %v137 = vld [vmem:[#allocation2 + $0x360] sm:$0xff]
    %v138 = vld [vmem:[#allocation2 + $0x368] sm:$0xff]
    %v139 = vld [vmem:[#allocation2 + $0x370] sm:$0xff]
    %v140 = vld [vmem:[#allocation2 + $0x378] sm:$0xff]
    %v141 = vld [vmem:[#allocation2 + $0x380] sm:$0xff]
    %v142 = vld [vmem:[#allocation2 + $0x388] sm:$0xff]
    %v143 = vld [vmem:[#allocation2 + $0x390] sm:$0xff]
    %v144 = vld [vmem:[#allocation2 + $0x398] sm:$0xff]
    %v145 = vld [vmem:[#allocation2 + $0x3a0] sm:$0xff]
    %v146 = vld [vmem:[#allocation2 + $0x3a8] sm:$0xff]
    %v147 = vld [vmem:[#allocation2 + $0x3b0] sm:$0xff]
    %v148 = vld [vmem:[#allocation2 + $0x3b8] sm:$0xff]
    %v149 = vld [vmem:[#allocation2 + $0x3c0] sm:$0xff]
    %v150 = vld [vmem:[#allocation2 + $0x3c8] sm:$0xff]
    %v151 = vld [vmem:[#allocation2 + $0x3d0] sm:$0xff]
    %v152 = vld [vmem:[#allocation2 + $0x3d8] sm:$0xff]
    %v153 = vld [vmem:[#allocation2 + $0x3e0] sm:$0xff]
    %v154 = vld [vmem:[#allocation2 + $0x3e8] sm:$0xff]
    %v155 = vld [vmem:[#allocation2 + $0x3f0] sm:$0xff]
    %v156 = vld [vmem:[#allocation2 + $0x3f8] sm:$0xff]
    %v157 = vld [vmem:[#allocation2 + $0x400] sm:$0xff]
    %v158 = vld [vmem:[#allocation2 + $0x408] sm:$0xff]
    %v159 = vld [vmem:[#allocation2 + $0x410] sm:$0xff]
    %v160 = vld [vmem:[#allocation2 + $0x418] sm:$0xff]
    %v161 = vld [vmem:[#allocation2 + $0x420] sm:$0xff]
    %v162 = vld [vmem:[#allocation2 + $0x428] sm:$0xff]
    %v163 = vld [vmem:[#allocation2 + $0x430] sm:$0xff]
    %v164 = vld [vmem:[#allocation2 + $0x438] sm:$0xff]
    %v165 = vld [vmem:[#allocation2 + $0x440] sm:$0xff]
    %v166 = vld [vmem:[#allocation2 + $0x448] sm:$0xff]
    %v167 = vld [vmem:[#allocation2 + $0x450] sm:$0xff]
    %v168 = vld [vmem:[#allocation2 + $0x458] sm:$0xff]
    %v169 = vld [vmem:[#allocation2 + $0x460] sm:$0xff]
    %v170 = vld [vmem:[#allocation2 + $0x468] sm:$0xff]
    %v171 = vld [vmem:[#allocation2 + $0x470] sm:$0xff]
    %v172 = vld [vmem:[#allocation2 + $0x478] sm:$0xff]
    %v173 = vld [vmem:[#allocation2 + $0x480] sm:$0xff]
    %v174 = vld [vmem:[#allocation2 + $0x488] sm:$0xff]
    %v175 = vld [vmem:[#allocation2 + $0x490] sm:$0xff]
    %v176 = vld [vmem:[#allocation2 + $0x498] sm:$0xff]
    %v177 = vld [vmem:[#allocation2 + $0x4a0] sm:$0xff]
    %v178 = vld [vmem:[#allocation2 + $0x4a8] sm:$0xff]
    %v179 = vld [vmem:[#allocation2 + $0x4b0] sm:$0xff]
    %v180 = vld [vmem:[#allocation2 + $0x4b8] sm:$0xff]
    %v181 = vld [vmem:[#allocation2 + $0x4c0] sm:$0xff]
    %v182 = vld [vmem:[#allocation2 + $0x4c8] sm:$0xff]
    %v183 = vld [vmem:[#allocation2 + $0x4d0] sm:$0xff]
    %v184 = vld [vmem:[#allocation2 + $0x4d8] sm:$0xff]
    %v185 = vld [vmem:[#allocation2 + $0x4e0] sm:$0xff]
    %v186 = vld [vmem:[#allocation2 + $0x4e8] sm:$0xff]
    %v187 = vld [vmem:[#allocation2 + $0x4f0] sm:$0xff]
    %v188 = vld [vmem:[#allocation2 + $0x4f8] sm:$0xff]
    %v189 = vld [vmem:[#allocation2 + $0x500] sm:$0xff]
    %v190 = vld [vmem:[#allocation2 + $0x508] sm:$0xff]
    %v191 = vld [vmem:[#allocation2 + $0x510] sm:$0xff]
    %v192 = vld [vmem:[#allocation2 + $0x518] sm:$0xff]
    %v193 = vld [vmem:[#allocation2 + $0x520] sm:$0xff]
    %v194 = vld [vmem:[#allocation2 + $0x528] sm:$0xff]
    %v195 = vld [vmem:[#allocation2 + $0x530] sm:$0xff]
    %v196 = vld [vmem:[#allocation2 + $0x538] sm:$0xff]
    %v197 = vld [vmem:[#allocation2 + $0x540] sm:$0xff]
    %v198 = vld [vmem:[#allocation2 + $0x548] sm:$0xff]
    %v199 = vld [vmem:[#allocation2 + $0x550] sm:$0xff]
    %v200 = vld [vmem:[#allocation2 + $0x558] sm:$0xff]
    %v201 = vld [vmem:[#allocation2 + $0x560] sm:$0xff]
    %v202 = vld [vmem:[#allocation2 + $0x568] sm:$0xff]
    %v203 = vld [vmem:[#allocation2 + $0x570] sm:$0xff]
    %v204 = vld [vmem:[#allocation2 + $0x578] sm:$0xff]
    %v205 = vld [vmem:[#allocation2 + $0x580] sm:$0xff]
    %v206 = vld [vmem:[#allocation2 + $0x588] sm:$0xff]
    %v207 = vld [vmem:[#allocation2 + $0x590] sm:$0xff]
    %v208 = vld [vmem:[#allocation2 + $0x598] sm:$0xff]
    %v209 = vld [vmem:[#allocation2 + $0x5a0] sm:$0xff]
    %v210 = vld [vmem:[#allocation2 + $0x5a8] sm:$0xff]
    %v211 = vld [vmem:[#allocation2 + $0x5b0] sm:$0xff]
    %v212 = vld [vmem:[#allocation2 + $0x5b8] sm:$0xff]
    %v213 = vld [vmem:[#allocation2 + $0x5c0] sm:$0xff]
    %v214 = vld [vmem:[#allocation2 + $0x5c8] sm:$0xff]
    %v215 = vld [vmem:[#allocation2 + $0x5d0] sm:$0xff]
    %v216 = vld [vmem:[#allocation2 + $0x5d8] sm:$0xff]
    %v217 = vld [vmem:[#allocation2 + $0x5e0] sm:$0xff]
    %v218 = vld [vmem:[#allocation2 + $0x5e8] sm:$0xff]
    %v219 = vld [vmem:[#allocation2 + $0x5f0] sm:$0xff]
    %v220 = vld [vmem:[#allocation2 + $0x5f8] sm:$0xff]
    %v221 = vld [vmem:[#allocation2 + $0x600] sm:$0xff]
    %v222 = vld [vmem:[#allocation2 + $0x608] sm:$0xff]
    %v223 = vld [vmem:[#allocation2 + $0x610] sm:$0xff]
    %v224 = vld [vmem:[#allocation2 + $0x618] sm:$0xff]
    %v225 = vld [vmem:[#allocation2 + $0x620] sm:$0xff]
    %v226 = vld [vmem:[#allocation2 + $0x628] sm:$0xff]
    %v227 = vld [vmem:[#allocation2 + $0x630] sm:$0xff]
    %v228 = vld [vmem:[#allocation2 + $0x638] sm:$0xff]
    %v229 = vld [vmem:[#allocation2 + $0x640] sm:$0xff]
    %v230 = vld [vmem:[#allocation2 + $0x648] sm:$0xff]
    %v231 = vld [vmem:[#allocation2 + $0x650] sm:$0xff]
    %v232 = vld [vmem:[#allocation2 + $0x658] sm:$0xff]
    %v233 = vld [vmem:[#allocation2 + $0x660] sm:$0xff]
    %v234 = vld [vmem:[#allocation2 + $0x668] sm:$0xff]
    %v235 = vld [vmem:[#allocation2 + $0x670] sm:$0xff]
    %v236 = vld [vmem:[#allocation2 + $0x678] sm:$0xff]
    %v237 = vld [vmem:[#allocation2 + $0x680] sm:$0xff]
    %v238 = vld [vmem:[#allocation2 + $0x688] sm:$0xff]
    %v239 = vld [vmem:[#allocation2 + $0x690] sm:$0xff]
    %v240 = vld [vmem:[#allocation2 + $0x698] sm:$0xff]
    %v241 = vld [vmem:[#allocation2 + $0x6a0] sm:$0xff]
    %v242 = vld [vmem:[#allocation2 + $0x6a8] sm:$0xff]
    %v243 = vld [vmem:[#allocation2 + $0x6b0] sm:$0xff]
    %v244 = vld [vmem:[#allocation2 + $0x6b8] sm:$0xff]
    %v245 = vld [vmem:[#allocation2 + $0x6c0] sm:$0xff]
    %v246 = vld [vmem:[#allocation2 + $0x6c8] sm:$0xff]
    %v247 = vld [vmem:[#allocation2 + $0x6d0] sm:$0xff]
    %v248 = vld [vmem:[#allocation2 + $0x6d8] sm:$0xff]
    %v249 = vld [vmem:[#allocation2 + $0x6e0] sm:$0xff]
    %v250 = vld [vmem:[#allocation2 + $0x6e8] sm:$0xff]
    %v251 = vld [vmem:[#allocation2 + $0x6f0] sm:$0xff]
    %v252 = vld [vmem:[#allocation2 + $0x6f8] sm:$0xff]
    %v253 = vld [vmem:[#allocation2 + $0x700] sm:$0xff]
    %v254 = vld [vmem:[#allocation2 + $0x708] sm:$0xff]
    %v255 = vld [vmem:[#allocation2 + $0x710] sm:$0xff]
    %v256 = vld [vmem:[#allocation2 + $0x718] sm:$0xff]
    %v257 = vld [vmem:[#allocation2 + $0x720] sm:$0xff]
    %v258 = vld [vmem:[#allocation2 + $0x728] sm:$0xff]
    %v259 = vld [vmem:[#allocation2 + $0x730] sm:$0xff]
    %v260 = vld [vmem:[#allocation2 + $0x738] sm:$0xff]
    %v261 = vld [vmem:[#allocation2 + $0x740] sm:$0xff]
    %v262 = vld [vmem:[#allocation2 + $0x748] sm:$0xff]
    %v263 = vld [vmem:[#allocation2 + $0x750] sm:$0xff]
    %v264 = vld [vmem:[#allocation2 + $0x758] sm:$0xff]
    %v265 = vld [vmem:[#allocation2 + $0x760] sm:$0xff]
    %v266 = vld [vmem:[#allocation2 + $0x768] sm:$0xff]
    %v267 = vld [vmem:[#allocation2 + $0x770] sm:$0xff]
    %v268 = vld [vmem:[#allocation2 + $0x778] sm:$0xff]
    %v269 = vld [vmem:[#allocation2 + $0x780] sm:$0xff]
    %v270 = vld [vmem:[#allocation2 + $0x788] sm:$0xff]
    %v271 = vld [vmem:[#allocation2 + $0x790] sm:$0xff]
    %v272 = vld [vmem:[#allocation2 + $0x798] sm:$0xff]
    %v273 = vld [vmem:[#allocation2 + $0x7a0] sm:$0xff]
    %v274 = vld [vmem:[#allocation2 + $0x7a8] sm:$0xff]
    %v275 = vld [vmem:[#allocation2 + $0x7b0] sm:$0xff]
    %v276 = vld [vmem:[#allocation2 + $0x7b8] sm:$0xff]
    %v277 = vld [vmem:[#allocation2 + $0x7c0] sm:$0xff]
    %v278 = vld [vmem:[#allocation2 + $0x7c8] sm:$0xff]
    %v279 = vld [vmem:[#allocation2 + $0x7d0] sm:$0xff]
    %v280 = vld [vmem:[#allocation2 + $0x7d8] sm:$0xff]
    %v281 = vld [vmem:[#allocation2 + $0x7e0] sm:$0xff]
    %v282 = vld [vmem:[#allocation2 + $0x7e8] sm:$0xff]
    %v283 = vld [vmem:[#allocation2 + $0x7f0] sm:$0xff]
    %v284 = vld [vmem:[#allocation2 + $0x7f8] sm:$0xff]
    %v285 = vld [vmem:[%s1] sm:$0x3]
    %v287 = vlaneseq
    %v288 = vshrl.u32 %v287, 7
    %v289 = vsub.s32 0, %v288
    %v290 = vrot.slane %v285, %v289
    %v291 = vlaneseq
    %v292 = vshrl.u32 %v291, 7
    %v293 = vsub.s32 1, %v292
    %v294 = vrot.slane %v285, %v293
    %v297 = vmul.f32 %v29, %v290
    %v298 = vmul.f32 %v30, %v294
    %v299 = vmul.f32 %v31, %v290
    %v300 = vmul.f32 %v32, %v294
    %v301 = vmul.f32 %v33, %v290
    %v302 = vmul.f32 %v34, %v294
    %v303 = vmul.f32 %v35, %v290
    %v304 = vmul.f32 %v36, %v294
    %v305 = vmul.f32 %v37, %v290
    %v306 = vmul.f32 %v38, %v294
    %v307 = vmul.f32 %v39, %v290
    %v308 = vmul.f32 %v40, %v294
    %v309 = vmul.f32 %v41, %v290
    %v310 = vmul.f32 %v42, %v294
    %v311 = vmul.f32 %v43, %v290
    %v312 = vmul.f32 %v44, %v294
    %v313 = vmul.f32 %v45, %v290
    %v314 = vmul.f32 %v46, %v294
    %v315 = vmul.f32 %v47, %v290
    %v316 = vmul.f32 %v48, %v294
    %v317 = vmul.f32 %v49, %v290
    %v318 = vmul.f32 %v50, %v294
    %v319 = vmul.f32 %v51, %v290
    %v320 = vmul.f32 %v52, %v294
    %v321 = vmul.f32 %v53, %v290
    %v322 = vmul.f32 %v54, %v294
    %v323 = vmul.f32 %v55, %v290
    %v324 = vmul.f32 %v56, %v294
    %v325 = vmul.f32 %v57, %v290
    %v326 = vmul.f32 %v58, %v294
    %v327 = vmul.f32 %v59, %v290
    %v328 = vmul.f32 %v60, %v294
    %v329 = vmul.f32 %v61, %v290
    %v330 = vmul.f32 %v62, %v294
    %v331 = vmul.f32 %v63, %v290
    %v332 = vmul.f32 %v64, %v294
    %v333 = vmul.f32 %v65, %v290
    %v334 = vmul.f32 %v66, %v294
    %v335 = vmul.f32 %v67, %v290
    %v336 = vmul.f32 %v68, %v294
    %v337 = vmul.f32 %v69, %v290
    %v338 = vmul.f32 %v70, %v294
    %v339 = vmul.f32 %v71, %v290
    %v340 = vmul.f32 %v72, %v294
    %v341 = vmul.f32 %v73, %v290
    %v342 = vmul.f32 %v74, %v294
    %v343 = vmul.f32 %v75, %v290
    %v344 = vmul.f32 %v76, %v294
    %v345 = vmul.f32 %v77, %v290
    %v346 = vmul.f32 %v78, %v294
    %v347 = vmul.f32 %v79, %v290
    %v348 = vmul.f32 %v80, %v294
    %v349 = vmul.f32 %v81, %v290
    %v350 = vmul.f32 %v82, %v294
    %v351 = vmul.f32 %v83, %v290
    %v352 = vmul.f32 %v84, %v294
    %v353 = vmul.f32 %v85, %v290
    %v354 = vmul.f32 %v86, %v294
    %v355 = vmul.f32 %v87, %v290
    %v356 = vmul.f32 %v88, %v294
    %v357 = vmul.f32 %v89, %v290
    %v358 = vmul.f32 %v90, %v294
    %v359 = vmul.f32 %v91, %v290
    %v360 = vmul.f32 %v92, %v294
    %v361 = vmul.f32 %v93, %v290
    %v362 = vmul.f32 %v94, %v294
    %v363 = vmul.f32 %v95, %v290
    %v364 = vmul.f32 %v96, %v294
    %v365 = vmul.f32 %v97, %v290
    %v366 = vmul.f32 %v98, %v294
    %v367 = vmul.f32 %v99, %v290
    %v368 = vmul.f32 %v100, %v294
    %v369 = vmul.f32 %v101, %v290
    %v370 = vmul.f32 %v102, %v294
    %v371 = vmul.f32 %v103, %v290
    %v372 = vmul.f32 %v104, %v294
    %v373 = vmul.f32 %v105, %v290
    %v374 = vmul.f32 %v106, %v294
    %v375 = vmul.f32 %v107, %v290
    %v376 = vmul.f32 %v108, %v294
    %v377 = vmul.f32 %v109, %v290
    %v378 = vmul.f32 %v110, %v294
    %v379 = vmul.f32 %v111, %v290
    %v380 = vmul.f32 %v112, %v294
    %v381 = vmul.f32 %v113, %v290
    %v382 = vmul.f32 %v114, %v294
    %v383 = vmul.f32 %v115, %v290
    %v384 = vmul.f32 %v116, %v294
    %v385 = vmul.f32 %v117, %v290
    %v386 = vmul.f32 %v118, %v294
    %v387 = vmul.f32 %v119, %v290
    %v388 = vmul.f32 %v120, %v294
    %v389 = vmul.f32 %v121, %v290
    %v390 = vmul.f32 %v122, %v294
    %v391 = vmul.f32 %v123, %v290
    %v392 = vmul.f32 %v124, %v294
    %v393 = vmul.f32 %v125, %v290
    %v394 = vmul.f32 %v126, %v294
    %v395 = vmul.f32 %v127, %v290
    %v396 = vmul.f32 %v128, %v294
    %v397 = vmul.f32 %v129, %v290
    %v398 = vmul.f32 %v130, %v294
    %v399 = vmul.f32 %v131, %v290
    %v400 = vmul.f32 %v132, %v294
    %v401 = vmul.f32 %v133, %v290
    %v402 = vmul.f32 %v134, %v294
    %v403 = vmul.f32 %v135, %v290
    %v404 = vmul.f32 %v136, %v294
    %v405 = vmul.f32 %v137, %v290
    %v406 = vmul.f32 %v138, %v294
    %v407 = vmul.f32 %v139, %v290
    %v408 = vmul.f32 %v140, %v294
    %v409 = vmul.f32 %v141, %v290
    %v410 = vmul.f32 %v142, %v294
    %v411 = vmul.f32 %v143, %v290
    %v412 = vmul.f32 %v144, %v294
    %v413 = vmul.f32 %v145, %v290
    %v414 = vmul.f32 %v146, %v294
    %v415 = vmul.f32 %v147, %v290
    %v416 = vmul.f32 %v148, %v294
    %v417 = vmul.f32 %v149, %v290
    %v418 = vmul.f32 %v150, %v294
    %v419 = vmul.f32 %v151, %v290
    %v420 = vmul.f32 %v152, %v294
    %v421 = vmul.f32 %v153, %v290
    %v422 = vmul.f32 %v154, %v294
    %v423 = vmul.f32 %v155, %v290
    %v424 = vmul.f32 %v156, %v294
    %v425 = vmul.f32 %v157, %v290
    %v426 = vmul.f32 %v158, %v294
    %v427 = vmul.f32 %v159, %v290
    %v428 = vmul.f32 %v160, %v294
    %v429 = vmul.f32 %v161, %v290
    %v430 = vmul.f32 %v162, %v294
    %v431 = vmul.f32 %v163, %v290
    %v432 = vmul.f32 %v164, %v294
    %v433 = vmul.f32 %v165, %v290
    %v434 = vmul.f32 %v166, %v294
    %v435 = vmul.f32 %v167, %v290
    %v436 = vmul.f32 %v168, %v294
    %v437 = vmul.f32 %v169, %v290
    %v438 = vmul.f32 %v170, %v294
    %v439 = vmul.f32 %v171, %v290
    %v440 = vmul.f32 %v172, %v294
    %v441 = vmul.f32 %v173, %v290
    %v442 = vmul.f32 %v174, %v294
    %v443 = vmul.f32 %v175, %v290
    %v444 = vmul.f32 %v176, %v294
    %v445 = vmul.f32 %v177, %v290
    %v446 = vmul.f32 %v178, %v294
    %v447 = vmul.f32 %v179, %v290
    %v448 = vmul.f32 %v180, %v294
    %v449 = vmul.f32 %v181, %v290
    %v450 = vmul.f32 %v182, %v294
    %v451 = vmul.f32 %v183, %v290
    %v452 = vmul.f32 %v184, %v294
    %v453 = vmul.f32 %v185, %v290
    %v454 = vmul.f32 %v186, %v294
    %v455 = vmul.f32 %v187, %v290
    %v456 = vmul.f32 %v188, %v294
    %v457 = vmul.f32 %v189, %v290
    %v458 = vmul.f32 %v190, %v294
    %v459 = vmul.f32 %v191, %v290
    %v460 = vmul.f32 %v192, %v294
    %v461 = vmul.f32 %v193, %v290
    %v462 = vmul.f32 %v194, %v294
    %v463 = vmul.f32 %v195, %v290
    %v464 = vmul.f32 %v196, %v294
    %v465 = vmul.f32 %v197, %v290
    %v466 = vmul.f32 %v198, %v294
    %v467 = vmul.f32 %v199, %v290
    %v468 = vmul.f32 %v200, %v294
    %v469 = vmul.f32 %v201, %v290
    %v470 = vmul.f32 %v202, %v294
    %v471 = vmul.f32 %v203, %v290
    %v472 = vmul.f32 %v204, %v294
    %v473 = vmul.f32 %v205, %v290
    %v474 = vmul.f32 %v206, %v294
    %v475 = vmul.f32 %v207, %v290
    %v476 = vmul.f32 %v208, %v294
    %v477 = vmul.f32 %v209, %v290
    %v478 = vmul.f32 %v210, %v294
    %v479 = vmul.f32 %v211, %v290
    %v480 = vmul.f32 %v212, %v294
    %v481 = vmul.f32 %v213, %v290
    %v482 = vmul.f32 %v214, %v294
    %v483 = vmul.f32 %v215, %v290
    %v484 = vmul.f32 %v216, %v294
    %v485 = vmul.f32 %v217, %v290
    %v486 = vmul.f32 %v218, %v294
    %v487 = vmul.f32 %v219, %v290
    %v488 = vmul.f32 %v220, %v294
    %v489 = vmul.f32 %v221, %v290
    %v490 = vmul.f32 %v222, %v294
    %v491 = vmul.f32 %v223, %v290
    %v492 = vmul.f32 %v224, %v294
    %v493 = vmul.f32 %v225, %v290
    %v494 = vmul.f32 %v226, %v294
    %v495 = vmul.f32 %v227, %v290
    %v496 = vmul.f32 %v228, %v294
    %v497 = vmul.f32 %v229, %v290
    %v498 = vmul.f32 %v230, %v294
    %v499 = vmul.f32 %v231, %v290
    %v500 = vmul.f32 %v232, %v294
    %v501 = vmul.f32 %v233, %v290
    %v502 = vmul.f32 %v234, %v294
    %v503 = vmul.f32 %v235, %v290
    %v504 = vmul.f32 %v236, %v294
    %v505 = vmul.f32 %v237, %v290
    %v506 = vmul.f32 %v238, %v294
    %v507 = vmul.f32 %v239, %v290
    %v508 = vmul.f32 %v240, %v294
    %v509 = vmul.f32 %v241, %v290
    %v510 = vmul.f32 %v242, %v294
    %v511 = vmul.f32 %v243, %v290
    %v512 = vmul.f32 %v244, %v294
    %v513 = vmul.f32 %v245, %v290
    %v514 = vmul.f32 %v246, %v294
    %v515 = vmul.f32 %v247, %v290
    %v516 = vmul.f32 %v248, %v294
    %v517 = vmul.f32 %v249, %v290
    %v518 = vmul.f32 %v250, %v294
    %v519 = vmul.f32 %v251, %v290
    %v520 = vmul.f32 %v252, %v294
    %v521 = vmul.f32 %v253, %v290
    %v522 = vmul.f32 %v254, %v294
    %v523 = vmul.f32 %v255, %v290
    %v524 = vmul.f32 %v256, %v294
    %v525 = vmul.f32 %v257, %v290
    %v526 = vmul.f32 %v258, %v294
    %v527 = vmul.f32 %v259, %v290
    %v528 = vmul.f32 %v260, %v294
    %v529 = vmul.f32 %v261, %v290
    %v530 = vmul.f32 %v262, %v294
    %v531 = vmul.f32 %v263, %v290
    %v532 = vmul.f32 %v264, %v294
    %v533 = vmul.f32 %v265, %v290
    %v534 = vmul.f32 %v266, %v294
    %v535 = vmul.f32 %v267, %v290
    %v536 = vmul.f32 %v268, %v294
    %v537 = vmul.f32 %v269, %v290
    %v538 = vmul.f32 %v270, %v294
    %v539 = vmul.f32 %v271, %v290
    %v540 = vmul.f32 %v272, %v294
    %v541 = vmul.f32 %v273, %v290
    %v542 = vmul.f32 %v274, %v294
    %v543 = vmul.f32 %v275, %v290
    %v544 = vmul.f32 %v276, %v294
    %v545 = vmul.f32 %v277, %v290
    %v546 = vmul.f32 %v278, %v294
    %v547 = vmul.f32 %v279, %v290
    %v548 = vmul.f32 %v280, %v294
    %v549 = vmul.f32 %v281, %v290
    %v550 = vmul.f32 %v282, %v294
    %v551 = vmul.f32 %v283, %v290
    %v552 = vmul.f32 %v284, %v294
    %v553 = vld [vmem:[%s2] sm:$0x3]
    %v555 = vlaneseq
    %v556 = vshrl.u32 %v555, 7
    %v557 = vsub.s32 0, %v556
    %v558 = vrot.slane %v553, %v557
    %v559 = vlaneseq
    %v560 = vshrl.u32 %v559, 7
    %v561 = vsub.s32 1, %v560
    %v562 = vrot.slane %v553, %v561
    %v565 = vadd.f32 %v297, %v558
    %v566 = vadd.f32 %v298, %v562
    %v567 = vadd.f32 %v299, %v558
    %v568 = vadd.f32 %v300, %v562
    %v569 = vadd.f32 %v301, %v558
    %v570 = vadd.f32 %v302, %v562
    %v571 = vadd.f32 %v303, %v558
    %v572 = vadd.f32 %v304, %v562
    %v573 = vadd.f32 %v305, %v558
    %v574 = vadd.f32 %v306, %v562
    %v575 = vadd.f32 %v307, %v558
    %v576 = vadd.f32 %v308, %v562
    %v577 = vadd.f32 %v309, %v558
    %v578 = vadd.f32 %v310, %v562
    %v579 = vadd.f32 %v311, %v558
    %v580 = vadd.f32 %v312, %v562
    %v581 = vadd.f32 %v313, %v558
    %v582 = vadd.f32 %v314, %v562
    %v583 = vadd.f32 %v315, %v558
    %v584 = vadd.f32 %v316, %v562
    %v585 = vadd.f32 %v317, %v558
    %v586 = vadd.f32 %v318, %v562
    %v587 = vadd.f32 %v319, %v558
    %v588 = vadd.f32 %v320, %v562
    %v589 = vadd.f32 %v321, %v558
    %v590 = vadd.f32 %v322, %v562
    %v591 = vadd.f32 %v323, %v558
    %v592 = vadd.f32 %v324, %v562
    %v593 = vadd.f32 %v325, %v558
    %v594 = vadd.f32 %v326, %v562
    %v595 = vadd.f32 %v327, %v558
    %v596 = vadd.f32 %v328, %v562
    %v597 = vadd.f32 %v329, %v558
    %v598 = vadd.f32 %v330, %v562
    %v599 = vadd.f32 %v331, %v558
    %v600 = vadd.f32 %v332, %v562
    %v601 = vadd.f32 %v333, %v558
    %v602 = vadd.f32 %v334, %v562
    %v603 = vadd.f32 %v335, %v558
    %v604 = vadd.f32 %v336, %v562
    %v605 = vadd.f32 %v337, %v558
    %v606 = vadd.f32 %v338, %v562
    %v607 = vadd.f32 %v339, %v558
    %v608 = vadd.f32 %v340, %v562
    %v609 = vadd.f32 %v341, %v558
    %v610 = vadd.f32 %v342, %v562
    %v611 = vadd.f32 %v343, %v558
    %v612 = vadd.f32 %v344, %v562
    %v613 = vadd.f32 %v345, %v558
    %v614 = vadd.f32 %v346, %v562
    %v615 = vadd.f32 %v347, %v558
    %v616 = vadd.f32 %v348, %v562
    %v617 = vadd.f32 %v349, %v558
    %v618 = vadd.f32 %v350, %v562
    %v619 = vadd.f32 %v351, %v558
    %v620 = vadd.f32 %v352, %v562
    %v621 = vadd.f32 %v353, %v558
    %v622 = vadd.f32 %v354, %v562
    %v623 = vadd.f32 %v355, %v558
    %v624 = vadd.f32 %v356, %v562
    %v625 = vadd.f32 %v357, %v558
    %v626 = vadd.f32 %v358, %v562
    %v627 = vadd.f32 %v359, %v558
    %v628 = vadd.f32 %v360, %v562
    %v629 = vadd.f32 %v361, %v558
    %v630 = vadd.f32 %v362, %v562
    %v631 = vadd.f32 %v363, %v558
    %v632 = vadd.f32 %v364, %v562
    %v633 = vadd.f32 %v365, %v558
    %v634 = vadd.f32 %v366, %v562
    %v635 = vadd.f32 %v367, %v558
    %v636 = vadd.f32 %v368, %v562
    %v637 = vadd.f32 %v369, %v558
    %v638 = vadd.f32 %v370, %v562
    %v639 = vadd.f32 %v371, %v558
    %v640 = vadd.f32 %v372, %v562
    %v641 = vadd.f32 %v373, %v558
    %v642 = vadd.f32 %v374, %v562
    %v643 = vadd.f32 %v375, %v558
    %v644 = vadd.f32 %v376, %v562
    %v645 = vadd.f32 %v377, %v558
    %v646 = vadd.f32 %v378, %v562
    %v647 = vadd.f32 %v379, %v558
    %v648 = vadd.f32 %v380, %v562
    %v649 = vadd.f32 %v381, %v558
    %v650 = vadd.f32 %v382, %v562
    %v651 = vadd.f32 %v383, %v558
    %v652 = vadd.f32 %v384, %v562
    %v653 = vadd.f32 %v385, %v558
    %v654 = vadd.f32 %v386, %v562
    %v655 = vadd.f32 %v387, %v558
    %v656 = vadd.f32 %v388, %v562
    %v657 = vadd.f32 %v389, %v558
    %v658 = vadd.f32 %v390, %v562
    %v659 = vadd.f32 %v391, %v558
    %v660 = vadd.f32 %v392, %v562
    %v661 = vadd.f32 %v393, %v558
    %v662 = vadd.f32 %v394, %v562
    %v663 = vadd.f32 %v395, %v558
    %v664 = vadd.f32 %v396, %v562
    %v665 = vadd.f32 %v397, %v558
    %v666 = vadd.f32 %v398, %v562
    %v667 = vadd.f32 %v399, %v558
    %v668 = vadd.f32 %v400, %v562
    %v669 = vadd.f32 %v401, %v558
    %v670 = vadd.f32 %v402, %v562
    %v671 = vadd.f32 %v403, %v558
    %v672 = vadd.f32 %v404, %v562
    %v673 = vadd.f32 %v405, %v558
    %v674 = vadd.f32 %v406, %v562
    %v675 = vadd.f32 %v407, %v558
    %v676 = vadd.f32 %v408, %v562
    %v677 = vadd.f32 %v409, %v558
    %v678 = vadd.f32 %v410, %v562
    %v679 = vadd.f32 %v411, %v558
    %v680 = vadd.f32 %v412, %v562
    %v681 = vadd.f32 %v413, %v558
    %v682 = vadd.f32 %v414, %v562
    %v683 = vadd.f32 %v415, %v558
    %v684 = vadd.f32 %v416, %v562
    %v685 = vadd.f32 %v417, %v558
    %v686 = vadd.f32 %v418, %v562
    %v687 = vadd.f32 %v419, %v558
    %v688 = vadd.f32 %v420, %v562
    %v689 = vadd.f32 %v421, %v558
    %v690 = vadd.f32 %v422, %v562
    %v691 = vadd.f32 %v423, %v558
    %v692 = vadd.f32 %v424, %v562
    %v693 = vadd.f32 %v425, %v558
    %v694 = vadd.f32 %v426, %v562
    %v695 = vadd.f32 %v427, %v558
    %v696 = vadd.f32 %v428, %v562
    %v697 = vadd.f32 %v429, %v558
    %v698 = vadd.f32 %v430, %v562
    %v699 = vadd.f32 %v431, %v558
    %v700 = vadd.f32 %v432, %v562
    %v701 = vadd.f32 %v433, %v558
    %v702 = vadd.f32 %v434, %v562
    %v703 = vadd.f32 %v435, %v558
    %v704 = vadd.f32 %v436, %v562
    %v705 = vadd.f32 %v437, %v558
    %v706 = vadd.f32 %v438, %v562
    %v707 = vadd.f32 %v439, %v558
    %v708 = vadd.f32 %v440, %v562
    %v709 = vadd.f32 %v441, %v558
    %v710 = vadd.f32 %v442, %v562
    %v711 = vadd.f32 %v443, %v558
    %v712 = vadd.f32 %v444, %v562
    %v713 = vadd.f32 %v445, %v558
    %v714 = vadd.f32 %v446, %v562
    %v715 = vadd.f32 %v447, %v558
    %v716 = vadd.f32 %v448, %v562
    %v717 = vadd.f32 %v449, %v558
    %v718 = vadd.f32 %v450, %v562
    %v719 = vadd.f32 %v451, %v558
    %v720 = vadd.f32 %v452, %v562
    %v721 = vadd.f32 %v453, %v558
    %v722 = vadd.f32 %v454, %v562
    %v723 = vadd.f32 %v455, %v558
    %v724 = vadd.f32 %v456, %v562
    %v725 = vadd.f32 %v457, %v558
    %v726 = vadd.f32 %v458, %v562
    %v727 = vadd.f32 %v459, %v558
    %v728 = vadd.f32 %v460, %v562
    %v729 = vadd.f32 %v461, %v558
    %v730 = vadd.f32 %v462, %v562
    %v731 = vadd.f32 %v463, %v558
    %v732 = vadd.f32 %v464, %v562
    %v733 = vadd.f32 %v465, %v558
    %v734 = vadd.f32 %v466, %v562
    %v735 = vadd.f32 %v467, %v558
    %v736 = vadd.f32 %v468, %v562
    %v737 = vadd.f32 %v469, %v558
    %v738 = vadd.f32 %v470, %v562
    %v739 = vadd.f32 %v471, %v558
    %v740 = vadd.f32 %v472, %v562
    %v741 = vadd.f32 %v473, %v558
    %v742 = vadd.f32 %v474, %v562
    %v743 = vadd.f32 %v475, %v558
    %v744 = vadd.f32 %v476, %v562
    %v745 = vadd.f32 %v477, %v558
    %v746 = vadd.f32 %v478, %v562
    %v747 = vadd.f32 %v479, %v558
    %v748 = vadd.f32 %v480, %v562
    %v749 = vadd.f32 %v481, %v558
    %v750 = vadd.f32 %v482, %v562
    %v751 = vadd.f32 %v483, %v558
    %v752 = vadd.f32 %v484, %v562
    %v753 = vadd.f32 %v485, %v558
    %v754 = vadd.f32 %v486, %v562
    %v755 = vadd.f32 %v487, %v558
    %v756 = vadd.f32 %v488, %v562
    %v757 = vadd.f32 %v489, %v558
    %v758 = vadd.f32 %v490, %v562
    %v759 = vadd.f32 %v491, %v558
    %v760 = vadd.f32 %v492, %v562
    %v761 = vadd.f32 %v493, %v558
    %v762 = vadd.f32 %v494, %v562
    %v763 = vadd.f32 %v495, %v558
    %v764 = vadd.f32 %v496, %v562
    %v765 = vadd.f32 %v497, %v558
    %v766 = vadd.f32 %v498, %v562
    %v767 = vadd.f32 %v499, %v558
    %v768 = vadd.f32 %v500, %v562
    %v769 = vadd.f32 %v501, %v558
    %v770 = vadd.f32 %v502, %v562
    %v771 = vadd.f32 %v503, %v558
    %v772 = vadd.f32 %v504, %v562
    %v773 = vadd.f32 %v505, %v558
    %v774 = vadd.f32 %v506, %v562
    %v775 = vadd.f32 %v507, %v558
    %v776 = vadd.f32 %v508, %v562
    %v777 = vadd.f32 %v509, %v558
    %v778 = vadd.f32 %v510, %v562
    %v779 = vadd.f32 %v511, %v558
    %v780 = vadd.f32 %v512, %v562
    %v781 = vadd.f32 %v513, %v558
    %v782 = vadd.f32 %v514, %v562
    %v783 = vadd.f32 %v515, %v558
    %v784 = vadd.f32 %v516, %v562
    %v785 = vadd.f32 %v517, %v558
    %v786 = vadd.f32 %v518, %v562
    %v787 = vadd.f32 %v519, %v558
    %v788 = vadd.f32 %v520, %v562
    %v789 = vadd.f32 %v521, %v558
    %v790 = vadd.f32 %v522, %v562
    %v791 = vadd.f32 %v523, %v558
    %v792 = vadd.f32 %v524, %v562
    %v793 = vadd.f32 %v525, %v558
    %v794 = vadd.f32 %v526, %v562
    %v795 = vadd.f32 %v527, %v558
    %v796 = vadd.f32 %v528, %v562
    %v797 = vadd.f32 %v529, %v558
    %v798 = vadd.f32 %v530, %v562
    %v799 = vadd.f32 %v531, %v558
    %v800 = vadd.f32 %v532, %v562
    %v801 = vadd.f32 %v533, %v558
    %v802 = vadd.f32 %v534, %v562
    %v803 = vadd.f32 %v535, %v558
    %v804 = vadd.f32 %v536, %v562
    %v805 = vadd.f32 %v537, %v558
    %v806 = vadd.f32 %v538, %v562
    %v807 = vadd.f32 %v539, %v558
    %v808 = vadd.f32 %v540, %v562
    %v809 = vadd.f32 %v541, %v558
    %v810 = vadd.f32 %v542, %v562
    %v811 = vadd.f32 %v543, %v558
    %v812 = vadd.f32 %v544, %v562
    %v813 = vadd.f32 %v545, %v558
    %v814 = vadd.f32 %v546, %v562
    %v815 = vadd.f32 %v547, %v558
    %v816 = vadd.f32 %v548, %v562
    %v817 = vadd.f32 %v549, %v558
    %v818 = vadd.f32 %v550, %v562
    %v819 = vadd.f32 %v551, %v558
    %v820 = vadd.f32 %v552, %v562
    %821 = vst [vmem:[#allocation5] sm:$0xff] %v565
    %822 = vst [vmem:[#allocation5 + $0x8] sm:$0xff] %v566
    %823 = vst [vmem:[#allocation5 + $0x10] sm:$0xff] %v567
    %824 = vst [vmem:[#allocation5 + $0x18] sm:$0xff] %v568
    %825 = vst [vmem:[#allocation5 + $0x20] sm:$0xff] %v569
    %826 = vst [vmem:[#allocation5 + $0x28] sm:$0xff] %v570
    %827 = vst [vmem:[#allocation5 + $0x30] sm:$0xff] %v571
    %828 = vst [vmem:[#allocation5 + $0x38] sm:$0xff] %v572
    %829 = vst [vmem:[#allocation5 + $0x40] sm:$0xff] %v573
    %830 = vst [vmem:[#allocation5 + $0x48] sm:$0xff] %v574
    %831 = vst [vmem:[#allocation5 + $0x50] sm:$0xff] %v575
    %832 = vst [vmem:[#allocation5 + $0x58] sm:$0xff] %v576
    %833 = vst [vmem:[#allocation5 + $0x60] sm:$0xff] %v577
    %834 = vst [vmem:[#allocation5 + $0x68] sm:$0xff] %v578
    %835 = vst [vmem:[#allocation5 + $0x70] sm:$0xff] %v579
    %836 = vst [vmem:[#allocation5 + $0x78] sm:$0xff] %v580
    %837 = vst [vmem:[#allocation5 + $0x80] sm:$0xff] %v581
    %838 = vst [vmem:[#allocation5 + $0x88] sm:$0xff] %v582
    %839 = vst [vmem:[#allocation5 + $0x90] sm:$0xff] %v583
    %840 = vst [vmem:[#allocation5 + $0x98] sm:$0xff] %v584
    %841 = vst [vmem:[#allocation5 + $0xa0] sm:$0xff] %v585
    %842 = vst [vmem:[#allocation5 + $0xa8] sm:$0xff] %v586
    %843 = vst [vmem:[#allocation5 + $0xb0] sm:$0xff] %v587
    %844 = vst [vmem:[#allocation5 + $0xb8] sm:$0xff] %v588
    %845 = vst [vmem:[#allocation5 + $0xc0] sm:$0xff] %v589
    %846 = vst [vmem:[#allocation5 + $0xc8] sm:$0xff] %v590
    %847 = vst [vmem:[#allocation5 + $0xd0] sm:$0xff] %v591
    %848 = vst [vmem:[#allocation5 + $0xd8] sm:$0xff] %v592
    %849 = vst [vmem:[#allocation5 + $0xe0] sm:$0xff] %v593
    %850 = vst [vmem:[#allocation5 + $0xe8] sm:$0xff] %v594
    %851 = vst [vmem:[#allocation5 + $0xf0] sm:$0xff] %v595
    %852 = vst [vmem:[#allocation5 + $0xf8] sm:$0xff] %v596
    %853 = vst [vmem:[#allocation5 + $0x100] sm:$0xff] %v597
    %854 = vst [vmem:[#allocation5 + $0x108] sm:$0xff] %v598
    %855 = vst [vmem:[#allocation5 + $0x110] sm:$0xff] %v599
    %856 = vst [vmem:[#allocation5 + $0x118] sm:$0xff] %v600
    %857 = vst [vmem:[#allocation5 + $0x120] sm:$0xff] %v601
    %858 = vst [vmem:[#allocation5 + $0x128] sm:$0xff] %v602
    %859 = vst [vmem:[#allocation5 + $0x130] sm:$0xff] %v603
    %860 = vst [vmem:[#allocation5 + $0x138] sm:$0xff] %v604
    %861 = vst [vmem:[#allocation5 + $0x140] sm:$0xff] %v605
    %862 = vst [vmem:[#allocation5 + $0x148] sm:$0xff] %v606
    %863 = vst [vmem:[#allocation5 + $0x150] sm:$0xff] %v607
    %864 = vst [vmem:[#allocation5 + $0x158] sm:$0xff] %v608
    %865 = vst [vmem:[#allocation5 + $0x160] sm:$0xff] %v609
    %866 = vst [vmem:[#allocation5 + $0x168] sm:$0xff] %v610
    %867 = vst [vmem:[#allocation5 + $0x170] sm:$0xff] %v611
    %868 = vst [vmem:[#allocation5 + $0x178] sm:$0xff] %v612
    %869 = vst [vmem:[#allocation5 + $0x180] sm:$0xff] %v613
    %870 = vst [vmem:[#allocation5 + $0x188] sm:$0xff] %v614
    %871 = vst [vmem:[#allocation5 + $0x190] sm:$0xff] %v615
    %872 = vst [vmem:[#allocation5 + $0x198] sm:$0xff] %v616
    %873 = vst [vmem:[#allocation5 + $0x1a0] sm:$0xff] %v617
    %874 = vst [vmem:[#allocation5 + $0x1a8] sm:$0xff] %v618
    %875 = vst [vmem:[#allocation5 + $0x1b0] sm:$0xff] %v619
    %876 = vst [vmem:[#allocation5 + $0x1b8] sm:$0xff] %v620
    %877 = vst [vmem:[#allocation5 + $0x1c0] sm:$0xff] %v621
    %878 = vst [vmem:[#allocation5 + $0x1c8] sm:$0xff] %v622
    %879 = vst [vmem:[#allocation5 + $0x1d0] sm:$0xff] %v623
    %880 = vst [vmem:[#allocation5 + $0x1d8] sm:$0xff] %v624
    %881 = vst [vmem:[#allocation5 + $0x1e0] sm:$0xff] %v625
    %882 = vst [vmem:[#allocation5 + $0x1e8] sm:$0xff] %v626
    %883 = vst [vmem:[#allocation5 + $0x1f0] sm:$0xff] %v627
    %884 = vst [vmem:[#allocation5 + $0x1f8] sm:$0xff] %v628
    %885 = vst [vmem:[#allocation5 + $0x200] sm:$0xff] %v629
    %886 = vst [vmem:[#allocation5 + $0x208] sm:$0xff] %v630
    %887 = vst [vmem:[#allocation5 + $0x210] sm:$0xff] %v631
    %888 = vst [vmem:[#allocation5 + $0x218] sm:$0xff] %v632
    %889 = vst [vmem:[#allocation5 + $0x220] sm:$0xff] %v633
    %890 = vst [vmem:[#allocation5 + $0x228] sm:$0xff] %v634
    %891 = vst [vmem:[#allocation5 + $0x230] sm:$0xff] %v635
    %892 = vst [vmem:[#allocation5 + $0x238] sm:$0xff] %v636
    %893 = vst [vmem:[#allocation5 + $0x240] sm:$0xff] %v637
    %894 = vst [vmem:[#allocation5 + $0x248] sm:$0xff] %v638
    %895 = vst [vmem:[#allocation5 + $0x250] sm:$0xff] %v639
    %896 = vst [vmem:[#allocation5 + $0x258] sm:$0xff] %v640
    %897 = vst [vmem:[#allocation5 + $0x260] sm:$0xff] %v641
    %898 = vst [vmem:[#allocation5 + $0x268] sm:$0xff] %v642
    %899 = vst [vmem:[#allocation5 + $0x270] sm:$0xff] %v643
    %900 = vst [vmem:[#allocation5 + $0x278] sm:$0xff] %v644
    %901 = vst [vmem:[#allocation5 + $0x280] sm:$0xff] %v645
    %902 = vst [vmem:[#allocation5 + $0x288] sm:$0xff] %v646
    %903 = vst [vmem:[#allocation5 + $0x290] sm:$0xff] %v647
    %904 = vst [vmem:[#allocation5 + $0x298] sm:$0xff] %v648
    %905 = vst [vmem:[#allocation5 + $0x2a0] sm:$0xff] %v649
    %906 = vst [vmem:[#allocation5 + $0x2a8] sm:$0xff] %v650
    %907 = vst [vmem:[#allocation5 + $0x2b0] sm:$0xff] %v651
    %908 = vst [vmem:[#allocation5 + $0x2b8] sm:$0xff] %v652
    %909 = vst [vmem:[#allocation5 + $0x2c0] sm:$0xff] %v653
    %910 = vst [vmem:[#allocation5 + $0x2c8] sm:$0xff] %v654
    %911 = vst [vmem:[#allocation5 + $0x2d0] sm:$0xff] %v655
    %912 = vst [vmem:[#allocation5 + $0x2d8] sm:$0xff] %v656
    %913 = vst [vmem:[#allocation5 + $0x2e0] sm:$0xff] %v657
    %914 = vst [vmem:[#allocation5 + $0x2e8] sm:$0xff] %v658
    %915 = vst [vmem:[#allocation5 + $0x2f0] sm:$0xff] %v659
    %916 = vst [vmem:[#allocation5 + $0x2f8] sm:$0xff] %v660
    %917 = vst [vmem:[#allocation5 + $0x300] sm:$0xff] %v661
    %918 = vst [vmem:[#allocation5 + $0x308] sm:$0xff] %v662
    %919 = vst [vmem:[#allocation5 + $0x310] sm:$0xff] %v663
    %920 = vst [vmem:[#allocation5 + $0x318] sm:$0xff] %v664
    %921 = vst [vmem:[#allocation5 + $0x320] sm:$0xff] %v665
    %922 = vst [vmem:[#allocation5 + $0x328] sm:$0xff] %v666
    %923 = vst [vmem:[#allocation5 + $0x330] sm:$0xff] %v667
    %924 = vst [vmem:[#allocation5 + $0x338] sm:$0xff] %v668
    %925 = vst [vmem:[#allocation5 + $0x340] sm:$0xff] %v669
    %926 = vst [vmem:[#allocation5 + $0x348] sm:$0xff] %v670
    %927 = vst [vmem:[#allocation5 + $0x350] sm:$0xff] %v671
    %928 = vst [vmem:[#allocation5 + $0x358] sm:$0xff] %v672
    %929 = vst [vmem:[#allocation5 + $0x360] sm:$0xff] %v673
    %930 = vst [vmem:[#allocation5 + $0x368] sm:$0xff] %v674
    %931 = vst [vmem:[#allocation5 + $0x370] sm:$0xff] %v675
    %932 = vst [vmem:[#allocation5 + $0x378] sm:$0xff] %v676
    %933 = vst [vmem:[#allocation5 + $0x380] sm:$0xff] %v677
    %934 = vst [vmem:[#allocation5 + $0x388] sm:$0xff] %v678
    %935 = vst [vmem:[#allocation5 + $0x390] sm:$0xff] %v679
    %936 = vst [vmem:[#allocation5 + $0x398] sm:$0xff] %v680
    %937 = vst [vmem:[#allocation5 + $0x3a0] sm:$0xff] %v681
    %938 = vst [vmem:[#allocation5 + $0x3a8] sm:$0xff] %v682
    %939 = vst [vmem:[#allocation5 + $0x3b0] sm:$0xff] %v683
    %940 = vst [vmem:[#allocation5 + $0x3b8] sm:$0xff] %v684
    %941 = vst [vmem:[#allocation5 + $0x3c0] sm:$0xff] %v685
    %942 = vst [vmem:[#allocation5 + $0x3c8] sm:$0xff] %v686
    %943 = vst [vmem:[#allocation5 + $0x3d0] sm:$0xff] %v687
    %944 = vst [vmem:[#allocation5 + $0x3d8] sm:$0xff] %v688
    %945 = vst [vmem:[#allocation5 + $0x3e0] sm:$0xff] %v689
    %946 = vst [vmem:[#allocation5 + $0x3e8] sm:$0xff] %v690
    %947 = vst [vmem:[#allocation5 + $0x3f0] sm:$0xff] %v691
    %948 = vst [vmem:[#allocation5 + $0x3f8] sm:$0xff] %v692
    %949 = vst [vmem:[#allocation5 + $0x400] sm:$0xff] %v693
    %950 = vst [vmem:[#allocation5 + $0x408] sm:$0xff] %v694
    %951 = vst [vmem:[#allocation5 + $0x410] sm:$0xff] %v695
    %952 = vst [vmem:[#allocation5 + $0x418] sm:$0xff] %v696
    %953 = vst [vmem:[#allocation5 + $0x420] sm:$0xff] %v697
    %954 = vst [vmem:[#allocation5 + $0x428] sm:$0xff] %v698
    %955 = vst [vmem:[#allocation5 + $0x430] sm:$0xff] %v699
    %956 = vst [vmem:[#allocation5 + $0x438] sm:$0xff] %v700
    %957 = vst [vmem:[#allocation5 + $0x440] sm:$0xff] %v701
    %958 = vst [vmem:[#allocation5 + $0x448] sm:$0xff] %v702
    %959 = vst [vmem:[#allocation5 + $0x450] sm:$0xff] %v703
    %960 = vst [vmem:[#allocation5 + $0x458] sm:$0xff] %v704
    %961 = vst [vmem:[#allocation5 + $0x460] sm:$0xff] %v705
    %962 = vst [vmem:[#allocation5 + $0x468] sm:$0xff] %v706
    %963 = vst [vmem:[#allocation5 + $0x470] sm:$0xff] %v707
    %964 = vst [vmem:[#allocation5 + $0x478] sm:$0xff] %v708
    %965 = vst [vmem:[#allocation5 + $0x480] sm:$0xff] %v709
    %966 = vst [vmem:[#allocation5 + $0x488] sm:$0xff] %v710
    %967 = vst [vmem:[#allocation5 + $0x490] sm:$0xff] %v711
    %968 = vst [vmem:[#allocation5 + $0x498] sm:$0xff] %v712
    %969 = vst [vmem:[#allocation5 + $0x4a0] sm:$0xff] %v713
    %970 = vst [vmem:[#allocation5 + $0x4a8] sm:$0xff] %v714
    %971 = vst [vmem:[#allocation5 + $0x4b0] sm:$0xff] %v715
    %972 = vst [vmem:[#allocation5 + $0x4b8] sm:$0xff] %v716
    %973 = vst [vmem:[#allocation5 + $0x4c0] sm:$0xff] %v717
    %974 = vst [vmem:[#allocation5 + $0x4c8] sm:$0xff] %v718
    %975 = vst [vmem:[#allocation5 + $0x4d0] sm:$0xff] %v719
    %976 = vst [vmem:[#allocation5 + $0x4d8] sm:$0xff] %v720
    %977 = vst [vmem:[#allocation5 + $0x4e0] sm:$0xff] %v721
    %978 = vst [vmem:[#allocation5 + $0x4e8] sm:$0xff] %v722
    %979 = vst [vmem:[#allocation5 + $0x4f0] sm:$0xff] %v723
    %980 = vst [vmem:[#allocation5 + $0x4f8] sm:$0xff] %v724
    %981 = vst [vmem:[#allocation5 + $0x500] sm:$0xff] %v725
    %982 = vst [vmem:[#allocation5 + $0x508] sm:$0xff] %v726
    %983 = vst [vmem:[#allocation5 + $0x510] sm:$0xff] %v727
    %984 = vst [vmem:[#allocation5 + $0x518] sm:$0xff] %v728
    %985 = vst [vmem:[#allocation5 + $0x520] sm:$0xff] %v729
    %986 = vst [vmem:[#allocation5 + $0x528] sm:$0xff] %v730
    %987 = vst [vmem:[#allocation5 + $0x530] sm:$0xff] %v731
    %988 = vst [vmem:[#allocation5 + $0x538] sm:$0xff] %v732
    %989 = vst [vmem:[#allocation5 + $0x540] sm:$0xff] %v733
    %990 = vst [vmem:[#allocation5 + $0x548] sm:$0xff] %v734
    %991 = vst [vmem:[#allocation5 + $0x550] sm:$0xff] %v735
    %992 = vst [vmem:[#allocation5 + $0x558] sm:$0xff] %v736
    %993 = vst [vmem:[#allocation5 + $0x560] sm:$0xff] %v737
    %994 = vst [vmem:[#allocation5 + $0x568] sm:$0xff] %v738
    %995 = vst [vmem:[#allocation5 + $0x570] sm:$0xff] %v739
    %996 = vst [vmem:[#allocation5 + $0x578] sm:$0xff] %v740
    %997 = vst [vmem:[#allocation5 + $0x580] sm:$0xff] %v741
    %998 = vst [vmem:[#allocation5 + $0x588] sm:$0xff] %v742
    %999 = vst [vmem:[#allocation5 + $0x590] sm:$0xff] %v743
    %1000 = vst [vmem:[#allocation5 + $0x598] sm:$0xff] %v744
    %1001 = vst [vmem:[#allocation5 + $0x5a0] sm:$0xff] %v745
    %1002 = vst [vmem:[#allocation5 + $0x5a8] sm:$0xff] %v746
    %1003 = vst [vmem:[#allocation5 + $0x5b0] sm:$0xff] %v747
    %1004 = vst [vmem:[#allocation5 + $0x5b8] sm:$0xff] %v748
    %1005 = vst [vmem:[#allocation5 + $0x5c0] sm:$0xff] %v749
    %1006 = vst [vmem:[#allocation5 + $0x5c8] sm:$0xff] %v750
    %1007 = vst [vmem:[#allocation5 + $0x5d0] sm:$0xff] %v751
    %1008 = vst [vmem:[#allocation5 + $0x5d8] sm:$0xff] %v752
    %1009 = vst [vmem:[#allocation5 + $0x5e0] sm:$0xff] %v753
    %1010 = vst [vmem:[#allocation5 + $0x5e8] sm:$0xff] %v754
    %1011 = vst [vmem:[#allocation5 + $0x5f0] sm:$0xff] %v755
    %1012 = vst [vmem:[#allocation5 + $0x5f8] sm:$0xff] %v756
    %1013 = vst [vmem:[#allocation5 + $0x600] sm:$0xff] %v757
    %1014 = vst [vmem:[#allocation5 + $0x608] sm:$0xff] %v758
    %1015 = vst [vmem:[#allocation5 + $0x610] sm:$0xff] %v759
    %1016 = vst [vmem:[#allocation5 + $0x618] sm:$0xff] %v760
    %1017 = vst [vmem:[#allocation5 + $0x620] sm:$0xff] %v761
    %1018 = vst [vmem:[#allocation5 + $0x628] sm:$0xff] %v762
    %1019 = vst [vmem:[#allocation5 + $0x630] sm:$0xff] %v763
    %1020 = vst [vmem:[#allocation5 + $0x638] sm:$0xff] %v764
    %1021 = vst [vmem:[#allocation5 + $0x640] sm:$0xff] %v765
    %1022 = vst [vmem:[#allocation5 + $0x648] sm:$0xff] %v766
    %1023 = vst [vmem:[#allocation5 + $0x650] sm:$0xff] %v767
    %1024 = vst [vmem:[#allocation5 + $0x658] sm:$0xff] %v768
    %1025 = vst [vmem:[#allocation5 + $0x660] sm:$0xff] %v769
    %1026 = vst [vmem:[#allocation5 + $0x668] sm:$0xff] %v770
    %1027 = vst [vmem:[#allocation5 + $0x670] sm:$0xff] %v771
    %1028 = vst [vmem:[#allocation5 + $0x678] sm:$0xff] %v772
    %1029 = vst [vmem:[#allocation5 + $0x680] sm:$0xff] %v773
    %1030 = vst [vmem:[#allocation5 + $0x688] sm:$0xff] %v774
    %1031 = vst [vmem:[#allocation5 + $0x690] sm:$0xff] %v775
    %1032 = vst [vmem:[#allocation5 + $0x698] sm:$0xff] %v776
    %1033 = vst [vmem:[#allocation5 + $0x6a0] sm:$0xff] %v777
    %1034 = vst [vmem:[#allocation5 + $0x6a8] sm:$0xff] %v778
    %1035 = vst [vmem:[#allocation5 + $0x6b0] sm:$0xff] %v779
    %1036 = vst [vmem:[#allocation5 + $0x6b8] sm:$0xff] %v780
    %1037 = vst [vmem:[#allocation5 + $0x6c0] sm:$0xff] %v781
    %1038 = vst [vmem:[#allocation5 + $0x6c8] sm:$0xff] %v782
    %1039 = vst [vmem:[#allocation5 + $0x6d0] sm:$0xff] %v783
    %1040 = vst [vmem:[#allocation5 + $0x6d8] sm:$0xff] %v784
    %1041 = vst [vmem:[#allocation5 + $0x6e0] sm:$0xff] %v785
    %1042 = vst [vmem:[#allocation5 + $0x6e8] sm:$0xff] %v786
    %1043 = vst [vmem:[#allocation5 + $0x6f0] sm:$0xff] %v787
    %1044 = vst [vmem:[#allocation5 + $0x6f8] sm:$0xff] %v788
    %1045 = vst [vmem:[#allocation5 + $0x700] sm:$0xff] %v789
    %1046 = vst [vmem:[#allocation5 + $0x708] sm:$0xff] %v790
    %1047 = vst [vmem:[#allocation5 + $0x710] sm:$0xff] %v791
    %1048 = vst [vmem:[#allocation5 + $0x718] sm:$0xff] %v792
    %1049 = vst [vmem:[#allocation5 + $0x720] sm:$0xff] %v793
    %1050 = vst [vmem:[#allocation5 + $0x728] sm:$0xff] %v794
    %1051 = vst [vmem:[#allocation5 + $0x730] sm:$0xff] %v795
    %1052 = vst [vmem:[#allocation5 + $0x738] sm:$0xff] %v796
    %1053 = vst [vmem:[#allocation5 + $0x740] sm:$0xff] %v797
    %1054 = vst [vmem:[#allocation5 + $0x748] sm:$0xff] %v798
    %1055 = vst [vmem:[#allocation5 + $0x750] sm:$0xff] %v799
    %1056 = vst [vmem:[#allocation5 + $0x758] sm:$0xff] %v800
    %1057 = vst [vmem:[#allocation5 + $0x760] sm:$0xff] %v801
    %1058 = vst [vmem:[#allocation5 + $0x768] sm:$0xff] %v802
    %1059 = vst [vmem:[#allocation5 + $0x770] sm:$0xff] %v803
    %1060 = vst [vmem:[#allocation5 + $0x778] sm:$0xff] %v804
    %1061 = vst [vmem:[#allocation5 + $0x780] sm:$0xff] %v805
    %1062 = vst [vmem:[#allocation5 + $0x788] sm:$0xff] %v806
    %1063 = vst [vmem:[#allocation5 + $0x790] sm:$0xff] %v807
    %1064 = vst [vmem:[#allocation5 + $0x798] sm:$0xff] %v808
    %1065 = vst [vmem:[#allocation5 + $0x7a0] sm:$0xff] %v809
    %1066 = vst [vmem:[#allocation5 + $0x7a8] sm:$0xff] %v810
    %1067 = vst [vmem:[#allocation5 + $0x7b0] sm:$0xff] %v811
    %1068 = vst [vmem:[#allocation5 + $0x7b8] sm:$0xff] %v812
    %1069 = vst [vmem:[#allocation5 + $0x7c0] sm:$0xff] %v813
    %1070 = vst [vmem:[#allocation5 + $0x7c8] sm:$0xff] %v814
    %1071 = vst [vmem:[#allocation5 + $0x7d0] sm:$0xff] %v815
    %1072 = vst [vmem:[#allocation5 + $0x7d8] sm:$0xff] %v816
    %1073 = vst [vmem:[#allocation5 + $0x7e0] sm:$0xff] %v817
    %1074 = vst [vmem:[#allocation5 + $0x7e8] sm:$0xff] %v818
    %1075 = vst [vmem:[#allocation5 + $0x7f0] sm:$0xff] %v819
    %1076 = vst [vmem:[#allocation5 + $0x7f8] sm:$0xff] %v820
    // Predicated region
    $region18: #{tpu_custom_call.1} parent=1 // pred_check
      _
    $region19: #{tpu_custom_call.1} parent=1 // pred_check_branch
      %1078 = sbr.rel (0) target = $region21
    $region20: #{tpu_custom_call.1} parent=1 // pred_region
      %s1080 = ssub.s32 32768, 32768
      %1081 = vsyncadd [#allocation4], %s1080
      %s1082 = sshll.u32 [#allocation5], 4
      %s1083 = int_to_ptr.vmem [resolvable:$true] %s1082
      %1088 = dma.vmem_to_hbm [thread:$0]  %s1083, 32768, %s3, [#allocation4], 256, 256, 16
    $region21: #{tpu_custom_call.1} parent=1 // pred_fallthru
      _
    // Predicated region
    $region22: #{tpu_custom_call.1} parent=1 // pred_check
      _
    $region23: #{tpu_custom_call.1} parent=1 // pred_check_branch
      %1090 = sbr.rel (0) target = $region25
    $region24: #{tpu_custom_call.1} parent=1 // pred_region
      %1091 = dma.done [#allocation4], 32768
    $region25: #{tpu_custom_call.1} parent=1 // pred_fallthru
      _
    %1092 = vsyncpa [#allocation3], 1
    %1093 = vsyncpa [#allocation4], 1

</llo_original>
